<compile_context>
chip_gen: v5e
topology: v5e:2x2
jax: 0.10.0
libtpu: 0.0.40
codegen_flags: <defaults>
</compile_context>

<pallas_src>
import functools
import math
import random

import jax
import jax.numpy as jnp
from jax import lax
from jax.experimental import pallas as pl
from jax.experimental.pallas import tpu as pltpu

_FUSED_INTERMEDIATE_MAX = 4 * 1024 * 1024  # max bytes for the (C_total*R, TP) f32 intermediate


def _vmem_capacity_bytes():
    """Physical VMEM per core; falls back to 128 MiB when the query is unavailable (interpret/CPU)."""
    try:
        return int(pltpu.get_tpu_info().vmem_capacity_bytes)
    except Exception:
        return 128 * 1024 * 1024


def _vmem_limit_bytes(cap):
    # Generation-aware scoped-VMEM budget: ~96 MiB on 128 MiB parts (v5e/v6e), ~48 MiB on v7x,
    # leaving headroom for Mosaic internal scratch.
    return max(32 * 1024 * 1024, (cap * 3) // 4)


def _choose_pixel_tile(p, tp_max):
    """Lane-aligned pixel tile; P is padded up so every tile is full (unmasked lane-dense stores)."""
    tp_max = max(256, (tp_max // 256) * 256)
    if p <= tp_max:
        tp = ((p + 127) // 128) * 128
    else:
        tp = tp_max
    p_pad = ((p + tp - 1) // tp) * tp
    return tp, p_pad // tp, p_pad


def _aug_kernel(seed_ref, planes_ref, gxy_ref, out_img_ref, out_lbl_ref, *,
                c, cl, h, w, k_dim, r_dim, contract_w, noise_scale, fuse_whole, chunks):
    """One (batch, pixel-tile) step of grid_sample(border, align_corners=False) + noise + threshold.

    seed_ref:    (1,)                       int32 SMEM (scalar prefetch) noise seed
    planes_ref:  (1, (C+CL)*R, K)           bf16  image+label channels, VMEM resident per batch item
    gxy_ref:     (2, TP)                    f32   normalized sample coords (x row 0, y row 1)
    out_img_ref: (1, C, TP)                 f32   sampled (+noise) input pixels, lane-dense
    out_lbl_ref: (1, CL, TP)                i8    thresholded label pixels (0/1), lane-dense
    """
    tp = gxy_ref.shape[1]
    c_total = c + cl

    gx = gxy_ref[0:1, :]                                   # (1, TP)
    gy = gxy_ref[1:2, :]                                   # (1, TP)

    # Unnormalize (align_corners=False) and clamp to the border: with clamped source coordinates
    # the tent weights below reproduce bilinear + padding_mode='border' exactly.
    ix = jnp.clip(((gx + 1.0) * w - 1.0) * 0.5, 0.0, float(w - 1))
    iy = jnp.clip(((gy + 1.0) * h - 1.0) * 0.5, 0.0, float(h - 1))
    ik = ix if contract_w else iy      # coord along the MXU-contracted spatial axis (size k_dim)
    ir = iy if contract_w else ix      # coord along the VPU-reduced spatial axis (size r_dim)

    # Tent weights for the contracted axis, (K, TP) so TP stays on lanes; bf16 MXU operand.
    kk = lax.broadcasted_iota(jnp.int32, (k_dim, tp), 0).astype(jnp.float32)
    wk = jnp.maximum(0.0, 1.0 - jnp.abs(kk - ik)).astype(jnp.bfloat16)      # (K, TP)

    if fuse_whole:
        # Single fused MXU dot for all image+label channels (one RHS weight push per tile).
        s = jnp.dot(planes_ref[0], wk, preferred_element_type=jnp.float32)  # (C_total*R, TP)
        s = s.reshape(c_total, r_dim, tp)
        rr = lax.broadcasted_iota(jnp.int32, (r_dim, tp), 0).astype(jnp.float32)
        wr = jnp.maximum(0.0, 1.0 - jnp.abs(rr - ir))                       # (R, TP)
        vals = jnp.sum(s * wr[None, :, :], axis=1)                          # (C_total, TP) f32
    else:
        # Large images: per-channel R-chunked accumulation so the f32 intermediate is bounded at
        # (chunk_rows, TP); carry is a single (1, TP) row per channel.
        rows = []
        for ch in range(c_total):
            acc = jnp.zeros((1, tp), jnp.float32)
            for (r0, rc) in chunks:
                lhs = planes_ref[0, ch * r_dim + r0:ch * r_dim + r0 + rc, :]   # (rc, K) bf16
                s = jnp.dot(lhs, wk, preferred_element_type=jnp.float32)       # (rc, TP)
                rr = (lax.broadcasted_iota(jnp.int32, (rc, tp), 0).astype(jnp.float32)
                      + float(r0))
                wrc = jnp.maximum(0.0, 1.0 - jnp.abs(rr - ir))
                acc = acc + jnp.sum(s * wrc, axis=0, keepdims=True)
            rows.append(acc)
        vals = jnp.concatenate(rows, axis=0)                                   # (C_total, TP)

    out_img = vals[:c, :]
    out_lbl = vals[c:, :]

    if noise_scale:  # static Python gate -- zero traced code when noise is disabled
        # Portable counter-based hash noise (no TPU-only PRNG primitives; runs in interpret mode):
        # 4 variance-corrected uniform draws ~ N(0,1).  ~24 VPU ops/element, negligible vs the MXU.
        lane = lax.broadcasted_iota(jnp.int32, (c, tp), 1)
        chan = lax.broadcasted_iota(jnp.int32, (c, tp), 0)
        pix = pl.program_id(1) * tp + lane
        elem = (pl.program_id(0) * c + chan) * (pl.num_programs(1) * tp) + pix
        seed_term = seed_ref[0] * jnp.int32(0x27D4EB2F)

        def _mix(v):
            # xorshift-multiply mixer; int32 wrap-around arithmetic, sign bit masked before shift
            # so the arithmetic shift behaves like a logical shift.
            v = v * jnp.int32(0x7FEB352D)
            v = v ^ ((v & jnp.int32(0x7FFFFFFF)) >> 15)
            v = v * jnp.int32(0x846CA68B - (1 << 32))
            v = v ^ ((v & jnp.int32(0x7FFFFFFF)) >> 13)
            return v

        usum = jnp.zeros((c, tp), jnp.float32)
        for k_draw in range(4):
            bits = _mix(elem * jnp.int32(4) + jnp.int32(k_draw) + seed_term)
            usum = usum + (bits & jnp.int32(0x7FFFFF)).astype(jnp.float32) * (1.0 / (1 << 23))
        noise = (usum - 2.0) * 1.7320508075688772     # var(sum of 4 U(0,1)) = 1/3
        out_img = out_img + noise * noise_scale

    out_img_ref[0] = out_img.astype(out_img_ref.dtype)
    out_lbl_ref[0] = (out_lbl > 0.5).astype(jnp.int8)


def pallas_segmentation_augment(input_g, label_g, gxy, seed, noise_scale, *,
                                tp_max=None, force_chunked=False, chunk_rows=256):
    """input_g: (B,C,H,W); label_g: (B,CL,H,W); gxy: (2,H*W) -> ((B,C,P) f32, (B,CL,P) i8)."""
    b, c, h, w = input_g.shape
    cl = label_g.shape[1]
    c_total = c + cl
    p = h * w

    cap = _vmem_capacity_bytes()
    if tp_max is None:
        tp_max = 4096 if cap >= 96 * 1024 * 1024 else 2048
    tp, num_tiles, p_pad = _choose_pixel_tile(p, tp_max)

    # Contract the LARGER spatial axis on the MXU (K-dim utilization); VPU tent-reduce the other.
    contract_w = w >= h
    planes = jnp.concatenate([input_g.astype(jnp.bfloat16),
                              label_g.astype(jnp.bfloat16)], axis=1)        # (B, C+CL, H, W)
    if contract_w:
        k_dim, r_dim = w, h
        planes2d = planes.reshape(b, c_total * h, w)
    else:
        k_dim, r_dim = h, w
        planes2d = jnp.swapaxes(planes, 2, 3).reshape(b, c_total * w, h)

    gxy = gxy.astype(jnp.float32)
    if p_pad != p:
        gxy = jnp.pad(gxy, ((0, 0), (0, p_pad - p)))      # padded pixels are valid, discarded later

    fuse_whole = (not force_chunked
                  and c_total * r_dim * tp * 4 <= _FUSED_INTERMEDIATE_MAX
                  and r_dim % 8 == 0)
    if fuse_whole:
        chunks = ()
    else:
        rc = max(8, min(chunk_rows, r_dim))
        chunks = tuple((r0, min(rc, r_dim - r0)) for r0 in range(0, r_dim, rc))

    kernel = functools.partial(
        _aug_kernel, c=c, cl=cl, h=h, w=w, k_dim=k_dim, r_dim=r_dim,
        contract_w=contract_w, noise_scale=float(noise_scale),
        fuse_whole=fuse_whole, chunks=chunks)

    out_img, out_lbl = pl.pallas_call(
        kernel,
        out_shape=(jax.ShapeDtypeStruct((b, c, p_pad), jnp.float32),
                   jax.ShapeDtypeStruct((b, cl, p_pad), jnp.int8)),
        grid_spec=pltpu.PrefetchScalarGridSpec(
            num_scalar_prefetch=1,                         # seed -> SMEM
            grid=(b, num_tiles),
            in_specs=[
                # Image+label block only changes on the (slow) batch axis -> stays VMEM resident
                # across pixel tiles.  TODO(synk): on v7x add pipeline_mode=pl.Buffered(1) here to
                # save one image-sized VMEM copy (keep default double-buffering on 128 MiB parts).
                pl.BlockSpec((1, c_total * r_dim, k_dim), lambda i, j, s: (i, 0, 0)),
                pl.BlockSpec((2, tp), lambda i, j, s: (0, j)),
            ],
            out_specs=[
                pl.BlockSpec((1, c, tp), lambda i, j, s: (i, 0, j)),
                pl.BlockSpec((1, cl, tp), lambda i, j, s: (i, 0, j)),
            ],
        ),
        compiler_params=pltpu.CompilerParams(
            dimension_semantics=("parallel", "arbitrary"),   # batch-axis split on v7x megacore
            vmem_limit_bytes=_vmem_limit_bytes(cap),
        ),
    )(seed, planes2d, gxy)

    if p_pad != p:
        out_img = out_img[:, :, :p]
        out_lbl = out_lbl[:, :, :p]
    return out_img, out_lbl


def affine_grid_2d(theta2x3, h, w):
    """F.affine_grid(theta, (B,C,H,W), align_corners=False) for a batch-shared theta -> (2, H*W)."""
    xs = (2.0 * jnp.arange(w, dtype=jnp.float32) + 1.0) / w - 1.0
    ys = (2.0 * jnp.arange(h, dtype=jnp.float32) + 1.0) / h - 1.0
    xg = jnp.broadcast_to(xs[None, :], (h, w)).reshape(-1)
    yg = jnp.broadcast_to(ys[:, None], (h, w)).reshape(-1)
    base = jnp.stack([xg, yg, jnp.ones(h * w, jnp.float32)], axis=0)   # (3, P)
    # TODO(synk): generating these coords fully in-kernel needs vectorized int div/mod by W to
    # recover (row, col) from the flat pixel index; kept as a tiny batch-free wrapper op instead.
    return theta2x3 @ base                                              # (2, P)


class SegmentationAugmentationPallas:
    """JAX/Pallas port of SegmentationAugmentation.forward."""

    def __init__(self, flip=None, offset=None, scale=None, rotate=None, noise=None, seed=0):
        self.flip = flip
        self.offset = offset
        self.scale = scale
        self.rotate = rotate
        self.noise = noise
        self._rng = random.Random(seed)   # deterministic augmentation-parameter draws

    def _build2d_transform(self):
        t = [[1.0, 0.0, 0.0], [0.0, 1.0, 0.0], [0.0, 0.0, 1.0]]
        for i in range(2):
            if self.flip:
                if self._rng.random() > 0.5:
                    t[i][i] *= -1.0
            if self.offset:
                # TODO(synk): original torch code indexes transform_t[i, 3] on a 3x3 eye (raises);
                # implemented the evident intent (translation column 2).
                t[i][2] = self.offset * (self._rng.random() * 2 - 1)
            if self.scale:
                # Replicated verbatim from the torch module (1.0 + scale + jitter), even though
                # the likely intent was 1.0 + scale * jitter.
                t[i][i] *= 1.0 + self.scale + (self._rng.random() * 2 - 1)
        if self.rotate:
            # TODO(synk): original torch code matmuls the 3x3 by a 4x4 rotation (shape mismatch);
            # implemented the evident 2D intent with a 3x3 rotation.
            ang = self._rng.random() * math.pi * 2
            s, c = math.sin(ang), math.cos(ang)
            rot = [[c, -s, 0.0], [s, c, 0.0], [0.0, 0.0, 1.0]]
            t = [[sum(t[r][k] * rot[k][cc] for k in range(3)) for cc in range(3)] for r in range(3)]
        return jnp.asarray(t, dtype=jnp.float32)

    def __call__(self, input_g, label_g, noise_key=None):
        b, c, h, w = input_g.shape
        cl = label_g.shape[1]

        transform = self._build2d_transform()          # (3, 3)
        theta = transform[:2, :]                       # one transform for the whole batch (.expand)
        gxy = affine_grid_2d(theta, h, w)              # (2, P), batch-invariant

        if self.noise:
            if noise_key is None:
                noise_key = jax.random.PRNGKey(self._rng.randrange(2 ** 31 - 1))
            seed_val = jax.random.randint(noise_key, (1,), 0, 2 ** 31 - 1, dtype=jnp.int32)
            noise_scale = float(self.noise)
        else:
            seed_val = jnp.zeros((1,), jnp.int32)
            noise_scale = 0.0

        out_img, out_lbl = pallas_segmentation_augment(
            input_g, label_g, gxy, seed_val, noise_scale)

        augmented_input = out_img.reshape(b, c, h, w)
        augmented_label = out_lbl.reshape(b, cl, h, w).astype(jnp.bool_)
        return augmented_input, augmented_label


if __name__ == "__main__":
    key = jax.random.PRNGKey(0)
    k_in, k_lbl, k_noise = jax.random.split(key, 3)

    B, C, H, W = 2, 4, 16, 16
    input_g = jax.random.normal(k_in, (B, C, H, W), jnp.float32)
    label_g = jax.random.uniform(k_lbl, (B, 1, H, W)) > 0.5        # bool label mask

    aug = SegmentationAugmentationPallas(
        flip=True, offset=0.1, scale=0.15, rotate=True, noise=0.02, seed=0)
    out_img, out_lbl = aug(input_g, label_g, noise_key=k_noise)
    jax.block_until_ready((out_img, out_lbl))
    assert out_img.shape == (B, C, H, W) and out_img.dtype == jnp.float32
    assert out_lbl.shape == (B, 1, H, W) and out_lbl.dtype == jnp.bool_

    # Exercise the chunked (large-image) code path and check it agrees with the fused path.
    theta = jnp.array([[0.9, -0.1, 0.05], [0.1, 0.9, -0.05]], jnp.float32)
    gxy = affine_grid_2d(theta, H, W)
    seed0 = jnp.zeros((1,), jnp.int32)
    img_a, _ = pallas_segmentation_augment(input_g, label_g, gxy, seed0, 0.0)
    img_b, _ = pallas_segmentation_augment(input_g, label_g, gxy, seed0, 0.0,
                                           force_chunked=True, chunk_rows=8)
    jax.block_until_ready((img_a, img_b))
    assert jnp.allclose(img_a, img_b, atol=1e-3, rtol=1e-3)

    print("KERNEL_OK")
</pallas_src>

<mosaic_0001>
module attributes {stable_mosaic.version = 11 : i64} {
  func.func @_aug_kernel(%arg0: i32, %arg1: i32, %arg2: memref<1xi32, #tpu.memory_space<smem>>, %arg3: memref<1x80x16xbf16, #tpu.memory_space<vmem>>, %arg4: memref<2x256xf32, #tpu.memory_space<vmem>>, %arg5: memref<1x4x256xf32, #tpu.memory_space<vmem>>, %arg6: memref<1x1x256xi8, #tpu.memory_space<vmem>>) attributes {dimension_semantics = [#tpu.dimension_semantics<parallel>, #tpu.dimension_semantics<arbitrary>], iteration_bounds = array<i64: 2, 1>, scalar_prefetch = 1 : i64, scratch_operands = 0 : i64, tpu.core_type = #tpu.core_type<tc>, window_params = [{transform_indices = @transform_0, window_bounds = array<i64: 1, 80, 16>}, {transform_indices = @transform_1, window_bounds = array<i64: 2, 256>}, {transform_indices = @transform_2, window_bounds = array<i64: 1, 4, 256>}, {transform_indices = @transform_3, window_bounds = array<i64: 1, 1, 256>}]} {
    %c0 = arith.constant 0 : index
    %c0_0 = arith.constant 0 : index
    %0 = vector.load %arg4[%c0, %c0_0] : memref<2x256xf32, #tpu.memory_space<vmem>>, vector<1x256xf32>
    %c1 = arith.constant 1 : index
    %c0_1 = arith.constant 0 : index
    %1 = vector.load %arg4[%c1, %c0_1] : memref<2x256xf32, #tpu.memory_space<vmem>>, vector<1x256xf32>
    %cst = arith.constant 1.000000e+00 : f32
    %2 = vector.broadcast %cst : f32 to vector<1x256xf32>
    %3 = arith.addf %0, %2 : vector<1x256xf32>
    %cst_2 = arith.constant 1.600000e+01 : f32
    %4 = vector.broadcast %cst_2 : f32 to vector<1x256xf32>
    %5 = arith.mulf %3, %4 : vector<1x256xf32>
    %cst_3 = arith.constant 1.000000e+00 : f32
    %6 = vector.broadcast %cst_3 : f32 to vector<1x256xf32>
    %7 = arith.subf %5, %6 : vector<1x256xf32>
    %cst_4 = arith.constant 5.000000e-01 : f32
    %8 = vector.broadcast %cst_4 : f32 to vector<1x256xf32>
    %9 = arith.mulf %7, %8 : vector<1x256xf32>
    %cst_5 = arith.constant 0.000000e+00 : f32
    %cst_6 = arith.constant 1.500000e+01 : f32
    %10 = vector.broadcast %cst_5 : f32 to vector<1x256xf32>
    %11 = arith.maximumf %10, %9 : vector<1x256xf32>
    %12 = vector.broadcast %cst_6 : f32 to vector<1x256xf32>
    %13 = arith.minimumf %12, %11 : vector<1x256xf32>
    %cst_7 = arith.constant 1.000000e+00 : f32
    %14 = vector.broadcast %cst_7 : f32 to vector<1x256xf32>
    %15 = arith.addf %1, %14 : vector<1x256xf32>
    %cst_8 = arith.constant 1.600000e+01 : f32
    %16 = vector.broadcast %cst_8 : f32 to vector<1x256xf32>
    %17 = arith.mulf %15, %16 : vector<1x256xf32>
    %cst_9 = arith.constant 1.000000e+00 : f32
    %18 = vector.broadcast %cst_9 : f32 to vector<1x256xf32>
    %19 = arith.subf %17, %18 : vector<1x256xf32>
    %cst_10 = arith.constant 5.000000e-01 : f32
    %20 = vector.broadcast %cst_10 : f32 to vector<1x256xf32>
    %21 = arith.mulf %19, %20 : vector<1x256xf32>
    %cst_11 = arith.constant 0.000000e+00 : f32
    %cst_12 = arith.constant 1.500000e+01 : f32
    %22 = vector.broadcast %cst_11 : f32 to vector<1x256xf32>
    %23 = arith.maximumf %22, %21 : vector<1x256xf32>
    %24 = vector.broadcast %cst_12 : f32 to vector<1x256xf32>
    %25 = arith.minimumf %24, %23 : vector<1x256xf32>
    %26 = tpu.iota {dimensions = array<i32: 0>} : vector<16x256xi32>
    %27 = arith.sitofp %26 : vector<16x256xi32> to vector<16x256xf32>
    %28 = vector.broadcast %13 : vector<1x256xf32> to vector<16x256xf32>
    %29 = arith.subf %27, %28 : vector<16x256xf32>
    %30 = math.absf %29 : vector<16x256xf32>
    %cst_13 = arith.constant 1.000000e+00 : f32
    %31 = vector.broadcast %cst_13 : f32 to vector<16x256xf32>
    %32 = arith.subf %31, %30 : vector<16x256xf32>
    %cst_14 = arith.constant 0.000000e+00 : f32
    %33 = vector.broadcast %cst_14 : f32 to vector<16x256xf32>
    %34 = arith.maximumf %33, %32 : vector<16x256xf32>
    %35 = arith.truncf %34 : vector<16x256xf32> to vector<16x256xbf16>
    %c0_15 = arith.constant 0 : index
    %c0_16 = arith.constant 0 : index
    %c0_17 = arith.constant 0 : index
    %36 = vector.load %arg3[%c0_15, %c0_16, %c0_17] : memref<1x80x16xbf16, #tpu.memory_space<vmem>>, vector<1x80x16xbf16>
    %37 = vector.shape_cast %36 : vector<1x80x16xbf16> to vector<80x16xbf16>
    %cst_18 = arith.constant dense<0.000000e+00> : vector<80x256xf32>
    %38 = tpu.matmul %37, %35, %cst_18 {dimension_numbers = #tpu.dot_dimension_numbers<[1], [0], [0], [1], [0, 0, 1, 1], [], []>} : vector<80x16xbf16>, vector<16x256xbf16>, vector<80x256xf32> -> vector<80x256xf32>
    %39 = vector.shape_cast %38 : vector<80x256xf32> to vector<5x16x256xf32>
    %40 = tpu.iota {dimensions = array<i32: 0>} : vector<16x256xi32>
    %41 = arith.sitofp %40 : vector<16x256xi32> to vector<16x256xf32>
    %42 = vector.broadcast %25 : vector<1x256xf32> to vector<16x256xf32>
    %43 = arith.subf %41, %42 : vector<16x256xf32>
    %44 = math.absf %43 : vector<16x256xf32>
    %cst_19 = arith.constant 1.000000e+00 : f32
    %45 = vector.broadcast %cst_19 : f32 to vector<16x256xf32>
    %46 = arith.subf %45, %44 : vector<16x256xf32>
    %cst_20 = arith.constant 0.000000e+00 : f32
    %47 = vector.broadcast %cst_20 : f32 to vector<16x256xf32>
    %48 = arith.maximumf %47, %46 : vector<16x256xf32>
    %49 = vector.shape_cast %48 : vector<16x256xf32> to vector<1x16x256xf32>
    %50 = vector.broadcast %49 : vector<1x16x256xf32> to vector<5x16x256xf32>
    %51 = arith.mulf %39, %50 : vector<5x16x256xf32>
    %cst_21 = arith.constant dense<0.000000e+00> : vector<5x256xf32>
    %52 = vector.multi_reduction <add>, %51, %cst_21 [1] : vector<5x16x256xf32> to vector<5x256xf32>
    %53 = vector.extract_strided_slice %52 {offsets = [0, 0], sizes = [4, 256], strides = [1, 1]} : vector<5x256xf32> to vector<4x256xf32>
    %54 = vector.extract_strided_slice %52 {offsets = [4, 0], sizes = [1, 256], strides = [1, 1]} : vector<5x256xf32> to vector<1x256xf32>
    %55 = tpu.iota {dimensions = array<i32: 1>} : vector<4x256xi32>
    %56 = tpu.iota {dimensions = array<i32: 0>} : vector<4x256xi32>
    %c256_i32 = arith.constant 256 : i32
    %57 = arith.muli %arg1, %c256_i32 : i32
    %58 = vector.broadcast %57 : i32 to vector<4x256xi32>
    %59 = arith.addi %58, %55 : vector<4x256xi32>
    %c4_i32 = arith.constant 4 : i32
    %60 = arith.muli %arg0, %c4_i32 : i32
    %61 = vector.broadcast %60 : i32 to vector<4x256xi32>
    %62 = arith.addi %61, %56 : vector<4x256xi32>
    %c256_i32_22 = arith.constant 256 : i32
    %63 = vector.broadcast %c256_i32_22 : i32 to vector<4x256xi32>
    %64 = arith.muli %62, %63 : vector<4x256xi32>
    %65 = arith.addi %64, %59 : vector<4x256xi32>
    %c0_23 = arith.constant 0 : index
    %66 = memref.load %arg2[%c0_23] : memref<1xi32, #tpu.memory_space<smem>>
    %c668265263_i32 = arith.constant 668265263 : i32
    %67 = arith.muli %66, %c668265263_i32 : i32
    %cst_24 = arith.constant 0.000000e+00 : f32
    %68 = vector.broadcast %cst_24 : f32 to vector<4x256xf32>
    %c4_i32_25 = arith.constant 4 : i32
    %69 = vector.broadcast %c4_i32_25 : i32 to vector<4x256xi32>
    %70 = arith.muli %65, %69 : vector<4x256xi32>
    %c0_i32 = arith.constant 0 : i32
    %71 = vector.broadcast %c0_i32 : i32 to vector<4x256xi32>
    %72 = arith.addi %70, %71 : vector<4x256xi32>
    %73 = vector.broadcast %67 : i32 to vector<4x256xi32>
    %74 = arith.addi %72, %73 : vector<4x256xi32>
    %c2146121005_i32 = arith.constant 2146121005 : i32
    %75 = vector.broadcast %c2146121005_i32 : i32 to vector<4x256xi32>
    %76 = arith.muli %74, %75 : vector<4x256xi32>
    %c2147483647_i32 = arith.constant 2147483647 : i32
    %77 = vector.broadcast %c2147483647_i32 : i32 to vector<4x256xi32>
    %78 = arith.andi %76, %77 : vector<4x256xi32>
    %c15_i32 = arith.constant 15 : i32
    %79 = vector.broadcast %c15_i32 : i32 to vector<4x256xi32>
    %80 = arith.shrsi %78, %79 : vector<4x256xi32>
    %81 = arith.xori %76, %80 : vector<4x256xi32>
    %c-2073254261_i32 = arith.constant -2073254261 : i32
    %82 = vector.broadcast %c-2073254261_i32 : i32 to vector<4x256xi32>
    %83 = arith.muli %81, %82 : vector<4x256xi32>
    %c2147483647_i32_26 = arith.constant 2147483647 : i32
    %84 = vector.broadcast %c2147483647_i32_26 : i32 to vector<4x256xi32>
    %85 = arith.andi %83, %84 : vector<4x256xi32>
    %c13_i32 = arith.constant 13 : i32
    %86 = vector.broadcast %c13_i32 : i32 to vector<4x256xi32>
    %87 = arith.shrsi %85, %86 : vector<4x256xi32>
    %88 = arith.xori %83, %87 : vector<4x256xi32>
    %c8388607_i32 = arith.constant 8388607 : i32
    %89 = vector.broadcast %c8388607_i32 : i32 to vector<4x256xi32>
    %90 = arith.andi %88, %89 : vector<4x256xi32>
    %91 = arith.sitofp %90 : vector<4x256xi32> to vector<4x256xf32>
    %cst_27 = arith.constant 1.1920929E-7 : f32
    %92 = vector.broadcast %cst_27 : f32 to vector<4x256xf32>
    %93 = arith.mulf %91, %92 : vector<4x256xf32>
    %94 = arith.addf %68, %93 : vector<4x256xf32>
    %c4_i32_28 = arith.constant 4 : i32
    %95 = vector.broadcast %c4_i32_28 : i32 to vector<4x256xi32>
    %96 = arith.muli %65, %95 : vector<4x256xi32>
    %c1_i32 = arith.constant 1 : i32
    %97 = vector.broadcast %c1_i32 : i32 to vector<4x256xi32>
    %98 = arith.addi %96, %97 : vector<4x256xi32>
    %99 = vector.broadcast %67 : i32 to vector<4x256xi32>
    %100 = arith.addi %98, %99 : vector<4x256xi32>
    %c2146121005_i32_29 = arith.constant 2146121005 : i32
    %101 = vector.broadcast %c2146121005_i32_29 : i32 to vector<4x256xi32>
    %102 = arith.muli %100, %101 : vector<4x256xi32>
    %c2147483647_i32_30 = arith.constant 2147483647 : i32
    %103 = vector.broadcast %c2147483647_i32_30 : i32 to vector<4x256xi32>
    %104 = arith.andi %102, %103 : vector<4x256xi32>
    %c15_i32_31 = arith.constant 15 : i32
    %105 = vector.broadcast %c15_i32_31 : i32 to vector<4x256xi32>
    %106 = arith.shrsi %104, %105 : vector<4x256xi32>
    %107 = arith.xori %102, %106 : vector<4x256xi32>
    %c-2073254261_i32_32 = arith.constant -2073254261 : i32
    %108 = vector.broadcast %c-2073254261_i32_32 : i32 to vector<4x256xi32>
    %109 = arith.muli %107, %108 : vector<4x256xi32>
    %c2147483647_i32_33 = arith.constant 2147483647 : i32
    %110 = vector.broadcast %c2147483647_i32_33 : i32 to vector<4x256xi32>
    %111 = arith.andi %109, %110 : vector<4x256xi32>
    %c13_i32_34 = arith.constant 13 : i32
    %112 = vector.broadcast %c13_i32_34 : i32 to vector<4x256xi32>
    %113 = arith.shrsi %111, %112 : vector<4x256xi32>
    %114 = arith.xori %109, %113 : vector<4x256xi32>
    %c8388607_i32_35 = arith.constant 8388607 : i32
    %115 = vector.broadcast %c8388607_i32_35 : i32 to vector<4x256xi32>
    %116 = arith.andi %114, %115 : vector<4x256xi32>
    %117 = arith.sitofp %116 : vector<4x256xi32> to vector<4x256xf32>
    %cst_36 = arith.constant 1.1920929E-7 : f32
    %118 = vector.broadcast %cst_36 : f32 to vector<4x256xf32>
    %119 = arith.mulf %117, %118 : vector<4x256xf32>
    %120 = arith.addf %94, %119 : vector<4x256xf32>
    %c4_i32_37 = arith.constant 4 : i32
    %121 = vector.broadcast %c4_i32_37 : i32 to vector<4x256xi32>
    %122 = arith.muli %65, %121 : vector<4x256xi32>
    %c2_i32 = arith.constant 2 : i32
    %123 = vector.broadcast %c2_i32 : i32 to vector<4x256xi32>
    %124 = arith.addi %122, %123 : vector<4x256xi32>
    %125 = vector.broadcast %67 : i32 to vector<4x256xi32>
    %126 = arith.addi %124, %125 : vector<4x256xi32>
    %c2146121005_i32_38 = arith.constant 2146121005 : i32
    %127 = vector.broadcast %c2146121005_i32_38 : i32 to vector<4x256xi32>
    %128 = arith.muli %126, %127 : vector<4x256xi32>
    %c2147483647_i32_39 = arith.constant 2147483647 : i32
    %129 = vector.broadcast %c2147483647_i32_39 : i32 to vector<4x256xi32>
    %130 = arith.andi %128, %129 : vector<4x256xi32>
    %c15_i32_40 = arith.constant 15 : i32
    %131 = vector.broadcast %c15_i32_40 : i32 to vector<4x256xi32>
    %132 = arith.shrsi %130, %131 : vector<4x256xi32>
    %133 = arith.xori %128, %132 : vector<4x256xi32>
    %c-2073254261_i32_41 = arith.constant -2073254261 : i32
    %134 = vector.broadcast %c-2073254261_i32_41 : i32 to vector<4x256xi32>
    %135 = arith.muli %133, %134 : vector<4x256xi32>
    %c2147483647_i32_42 = arith.constant 2147483647 : i32
    %136 = vector.broadcast %c2147483647_i32_42 : i32 to vector<4x256xi32>
    %137 = arith.andi %135, %136 : vector<4x256xi32>
    %c13_i32_43 = arith.constant 13 : i32
    %138 = vector.broadcast %c13_i32_43 : i32 to vector<4x256xi32>
    %139 = arith.shrsi %137, %138 : vector<4x256xi32>
    %140 = arith.xori %135, %139 : vector<4x256xi32>
    %c8388607_i32_44 = arith.constant 8388607 : i32
    %141 = vector.broadcast %c8388607_i32_44 : i32 to vector<4x256xi32>
    %142 = arith.andi %140, %141 : vector<4x256xi32>
    %143 = arith.sitofp %142 : vector<4x256xi32> to vector<4x256xf32>
    %cst_45 = arith.constant 1.1920929E-7 : f32
    %144 = vector.broadcast %cst_45 : f32 to vector<4x256xf32>
    %145 = arith.mulf %143, %144 : vector<4x256xf32>
    %146 = arith.addf %120, %145 : vector<4x256xf32>
    %c4_i32_46 = arith.constant 4 : i32
    %147 = vector.broadcast %c4_i32_46 : i32 to vector<4x256xi32>
    %148 = arith.muli %65, %147 : vector<4x256xi32>
    %c3_i32 = arith.constant 3 : i32
    %149 = vector.broadcast %c3_i32 : i32 to vector<4x256xi32>
    %150 = arith.addi %148, %149 : vector<4x256xi32>
    %151 = vector.broadcast %67 : i32 to vector<4x256xi32>
    %152 = arith.addi %150, %151 : vector<4x256xi32>
    %c2146121005_i32_47 = arith.constant 2146121005 : i32
    %153 = vector.broadcast %c2146121005_i32_47 : i32 to vector<4x256xi32>
    %154 = arith.muli %152, %153 : vector<4x256xi32>
    %c2147483647_i32_48 = arith.constant 2147483647 : i32
    %155 = vector.broadcast %c2147483647_i32_48 : i32 to vector<4x256xi32>
    %156 = arith.andi %154, %155 : vector<4x256xi32>
    %c15_i32_49 = arith.constant 15 : i32
    %157 = vector.broadcast %c15_i32_49 : i32 to vector<4x256xi32>
    %158 = arith.shrsi %156, %157 : vector<4x256xi32>
    %159 = arith.xori %154, %158 : vector<4x256xi32>
    %c-2073254261_i32_50 = arith.constant -2073254261 : i32
    %160 = vector.broadcast %c-2073254261_i32_50 : i32 to vector<4x256xi32>
    %161 = arith.muli %159, %160 : vector<4x256xi32>
    %c2147483647_i32_51 = arith.constant 2147483647 : i32
    %162 = vector.broadcast %c2147483647_i32_51 : i32 to vector<4x256xi32>
    %163 = arith.andi %161, %162 : vector<4x256xi32>
    %c13_i32_52 = arith.constant 13 : i32
    %164 = vector.broadcast %c13_i32_52 : i32 to vector<4x256xi32>
    %165 = arith.shrsi %163, %164 : vector<4x256xi32>
    %166 = arith.xori %161, %165 : vector<4x256xi32>
    %c8388607_i32_53 = arith.constant 8388607 : i32
    %167 = vector.broadcast %c8388607_i32_53 : i32 to vector<4x256xi32>
    %168 = arith.andi %166, %167 : vector<4x256xi32>
    %169 = arith.sitofp %168 : vector<4x256xi32> to vector<4x256xf32>
    %cst_54 = arith.constant 1.1920929E-7 : f32
    %170 = vector.broadcast %cst_54 : f32 to vector<4x256xf32>
    %171 = arith.mulf %169, %170 : vector<4x256xf32>
    %172 = arith.addf %146, %171 : vector<4x256xf32>
    %cst_55 = arith.constant 2.000000e+00 : f32
    %173 = vector.broadcast %cst_55 : f32 to vector<4x256xf32>
    %174 = arith.subf %172, %173 : vector<4x256xf32>
    %cst_56 = arith.constant 1.73205078 : f32
    %175 = vector.broadcast %cst_56 : f32 to vector<4x256xf32>
    %176 = arith.mulf %174, %175 : vector<4x256xf32>
    %cst_57 = arith.constant 2.000000e-02 : f32
    %177 = vector.broadcast %cst_57 : f32 to vector<4x256xf32>
    %178 = arith.mulf %176, %177 : vector<4x256xf32>
    %179 = arith.addf %53, %178 : vector<4x256xf32>
    %c0_58 = arith.constant 0 : index
    %c0_59 = arith.constant 0 : index
    %c0_60 = arith.constant 0 : index
    %180 = vector.load %arg5[%c0_58, %c0_59, %c0_60] : memref<1x4x256xf32, #tpu.memory_space<vmem>>, vector<1x4x256xf32>
    %181 = vector.shape_cast %180 : vector<1x4x256xf32> to vector<4x256xf32>
    %182 = vector.shape_cast %179 : vector<4x256xf32> to vector<1x4x256xf32>
    tpu.vector_store %arg5[%c0_58, %c0_59, %c0_60], %182 {strides = array<i32>} : memref<1x4x256xf32, #tpu.memory_space<vmem>>, vector<1x4x256xf32>,
    %cst_61 = arith.constant 5.000000e-01 : f32
    %183 = vector.broadcast %cst_61 : f32 to vector<1x256xf32>
    %184 = arith.cmpf ogt, %54, %183 : vector<1x256xf32>
    %185 = arith.extui %184 : vector<1x256xi1> to vector<1x256xi8>
    %c0_62 = arith.constant 0 : index
    %c0_63 = arith.constant 0 : index
    %c0_64 = arith.constant 0 : index
    %186 = vector.load %arg6[%c0_62, %c0_63, %c0_64] : memref<1x1x256xi8, #tpu.memory_space<vmem>>, vector<1x1x256xi8>
    %187 = vector.shape_cast %186 : vector<1x1x256xi8> to vector<1x256xi8>
    %188 = vector.shape_cast %185 : vector<1x256xi8> to vector<1x1x256xi8>
    tpu.vector_store %arg6[%c0_62, %c0_63, %c0_64], %188 {strides = array<i32>} : memref<1x1x256xi8, #tpu.memory_space<vmem>>, vector<1x1x256xi8>,
    return
  }
  func.func @transform_0(%arg0: i32, %arg1: i32, %arg2: memref<1xi32, #tpu.memory_space<smem>>) -> (i32, i32, i32) {
    %c0_i32 = arith.constant 0 : i32
    %c0_i32_0 = arith.constant 0 : i32
    %c0_i32_1 = arith.constant 0 : i32
    return %arg0, %c0_i32, %c0_i32_0 : i32, i32, i32
  }
  func.func @transform_1(%arg0: i32, %arg1: i32, %arg2: memref<1xi32, #tpu.memory_space<smem>>) -> (i32, i32) {
    %c0_i32 = arith.constant 0 : i32
    %c0_i32_0 = arith.constant 0 : i32
    return %c0_i32, %arg1 : i32, i32
  }
  func.func @transform_2(%arg0: i32, %arg1: i32, %arg2: memref<1xi32, #tpu.memory_space<smem>>) -> (i32, i32, i32) {
    %c0_i32 = arith.constant 0 : i32
    %c0_i32_0 = arith.constant 0 : i32
    return %arg0, %c0_i32, %arg1 : i32, i32, i32
  }
  func.func @transform_3(%arg0: i32, %arg1: i32, %arg2: memref<1xi32, #tpu.memory_space<smem>>) -> (i32, i32, i32) {
    %c0_i32 = arith.constant 0 : i32
    %c0_i32_0 = arith.constant 0 : i32
    return %arg0, %c0_i32, %arg1 : i32, i32, i32
  }
}

</mosaic_0001>

<llo_original>
// kernel: tpu_custom_call.1
$region0: #{tpu_custom_call.1}
  #allocation0 [shape = 'u32[]', space=smem, size = 0x4, offset = 0x4, fixed_abs, tag = 'smem constant byte address 0x4 - core index']
  #allocation1 [shape = 'u32[72,128]{1,0:T(1,128)}', space=vmem, size = 0x9000, scoped, tag = 'internal scratch']
  #allocation2 [shape = 's32[1]{0}', space=sflag, size = 0x4, scoped, tag = 'scoped memory for tpu_custom_call.1']
  #allocation3 [shape = 's32[1]{0:T(128)S(6)}', space=smem, size = 0x200, scoped, tag = 'prefetched SMEM operand 0']
  %s0 = inlined_call_operand.<no memory space> [shape: s32[1], index: 0, kind: input, shape index: {}]
  %s1 = inlined_call_operand.vmem [shape: bf16[2,80,16], index: 1, kind: input, shape index: {}]
  %s2 = inlined_call_operand.vmem [shape: f32[2,256], index: 2, kind: input, shape index: {}]
  %s3 = inlined_call_operand.hbm [shape: f32[2,4,256], index: 3, kind: output, shape index: {0}]
  %s4 = inlined_call_operand.vmem [shape: s8[2,1,256], index: 4, kind: output, shape index: {1}]
  %5 = xla_tuple %s3, %s4
  %s6 = sld [smem:[#allocation0]]
  $region49: #{tpu_custom_call.1} parent=0
    _
  %s8 = ssub.s32 1, %s6
  %s9 = scalar_select 0, %s8, %s6
  %10 = sst [smem:[#allocation3]] %s0
  $region1: #{tpu_custom_call.1} parent=0
    #allocation4 [shape = 'u8[8192]{0}', space=vmem, size = 0x2000, scoped, tag = 'output window, operand 0']
    #allocation5 [shape = 's32[2]{0}', space=sflag, size = 0x8, scoped, tag = 'scoped memory for tpu_custom_call.1']
    %11 = vsyncpa [#allocation5], 0
    %s12 = scalar_lea.sflag [#allocation5], 1
    %13 = vsyncpa %s12, 0
    loop: start=0, step=1, limit=4
    $region2: #{tpu_custom_call.1} parent=1 // loop_pre_header
      _
    $region3: #{tpu_custom_call.1} parent=1 // loop_header
      %s15 = sphi 0, %s19
      %p16 = scmp.ge.s32.totalorder %s15, 4
      %s22 = sphi 0, %s34
      %s23 = sphi 0, %s30
      %s24 = sphi 0, %s22
      %s25 = sphi 0, %s23
      %s26 = sphi 0, %s24
      %s27 = sphi 0, %s25
      %s37 = sphi 0, %s39
      %s40 = sphi 0, %s37
      %s41 = sphi 0, %s40
      %s57 = sphi 0, %s41
      %s63 = sphi 0, %s65
      %s66 = sphi 0, %s63
      %s67 = sphi 0, %s66
      %s83 = sphi 0, %s67
      %s91 = sphi 0, %s93
      %s94 = sphi 0, %s91
      %s95 = sphi 0, %s94
      %s111 = sphi 0, %s95
      %s119 = sphi 0, %s121
      %s122 = sphi 0, %s119
      %s123 = sphi 0, %s122
      %s139 = sphi 0, %s123
    $region4: #{tpu_custom_call.1} parent=1 // loop_header_branch
      %18 = sbr.rel (%p16) target = $region8
    $region5: #{tpu_custom_call.1} parent=1 // loop_body
      %s20 = ssub.s32 %s15, 1
      %s21 = ssub.s32 %s15, 2
      %s28 = sadd.s32 1, %s23
      %p29 = scmp.ge.s32.totalorder %s28, 1
      %s30 = scalar_select %p29, 0, %s28
      %s31 = sadd.s32 1, %s22
      %s32 = scalar_select %p29, %s31, %s22
      %p33 = scmp.ge.s32.totalorder %s32, 2
      %s34 = scalar_select %p33, 0, %s32
      %s35 = ssub.s32 %s22, %s34
      %p36 = scmp.eq.s32.totalorder %s35, 0
      %s38 = sadd.s32 %s37, 1
      %s39 = scalar_select %p36, %s37, %s38
      %p42 = pneg %p36
      %p43 = scmp.eq.s32.totalorder %s15, 1
      %p44 = por %p42, %p43
      %p45 = scmp.ne.s32.totalorder %s37, %s40
      %p46 = scmp.eq.s32.totalorder %s15, 0
      %p47 = por %p45, %p46
      %p48 = scmp.ne.s32.totalorder %s37, %s40
      %p49 = scmp.eq.s32.totalorder %s20, 1
      %p50 = por %p48, %p49
      %p51 = scmp.ne.s32.totalorder %s40, %s41
      %p52 = scmp.eq.s32.totalorder %s20, 0
      %p53 = por %p51, %p52
      %p54 = scmp.ne.s32.totalorder %s40, %s41
      %p55 = scmp.eq.s32.totalorder %s21, 1
      %p56 = por %p54, %p55
      %p58 = scmp.ne.s32.totalorder %s41, %s57
      %p59 = scmp.eq.s32.totalorder %s21, 0
      %p60 = por %p58, %p59
      %s61 = ssub.s32 %s23, %s30
      %p62 = scmp.eq.s32.totalorder %s61, 0
      %s64 = sadd.s32 %s63, 1
      %s65 = scalar_select %p62, %s63, %s64
      %p68 = pneg %p62
      %p69 = scmp.eq.s32.totalorder %s15, 1
      %p70 = por %p68, %p69
      %p71 = scmp.ne.s32.totalorder %s63, %s66
      %p72 = scmp.eq.s32.totalorder %s15, 0
      %p73 = por %p71, %p72
      %p74 = scmp.ne.s32.totalorder %s63, %s66
      %p75 = scmp.eq.s32.totalorder %s20, 1
      %p76 = por %p74, %p75
      %p77 = scmp.ne.s32.totalorder %s66, %s67
      %p78 = scmp.eq.s32.totalorder %s20, 0
      %p79 = por %p77, %p78
      %p80 = scmp.ne.s32.totalorder %s66, %s67
      %p81 = scmp.eq.s32.totalorder %s21, 1
      %p82 = por %p80, %p81
      %p84 = scmp.ne.s32.totalorder %s67, %s83
      %p85 = scmp.eq.s32.totalorder %s21, 0
      %p86 = por %p84, %p85
      %s87 = ssub.s32 %s22, %s34
      %s88 = ssub.s32 %s23, %s30
      %s89 = sor.u32 %s87, %s88
      %p90 = scmp.eq.s32.totalorder %s89, 0
      %s92 = sadd.s32 %s91, 1
      %s93 = scalar_select %p90, %s91, %s92
      %p96 = pneg %p90
      %p97 = scmp.eq.s32.totalorder %s15, 1
      %p98 = por %p96, %p97
      %p99 = scmp.ne.s32.totalorder %s91, %s94
      %p100 = scmp.eq.s32.totalorder %s15, 0
      %p101 = por %p99, %p100
      %p102 = scmp.ne.s32.totalorder %s91, %s94
      %p103 = scmp.eq.s32.totalorder %s20, 1
      %p104 = por %p102, %p103
      %p105 = scmp.ne.s32.totalorder %s94, %s95
      %p106 = scmp.eq.s32.totalorder %s20, 0
      %p107 = por %p105, %p106
      %p108 = scmp.ne.s32.totalorder %s94, %s95
      %p109 = scmp.eq.s32.totalorder %s21, 1
      %p110 = por %p108, %p109
      %p112 = scmp.ne.s32.totalorder %s95, %s111
      %p113 = scmp.eq.s32.totalorder %s21, 0
      %p114 = por %p112, %p113
      %s115 = ssub.s32 %s22, %s34
      %s116 = ssub.s32 %s23, %s30
      %s117 = sor.u32 %s115, %s116
      %p118 = scmp.eq.s32.totalorder %s117, 0
      %s120 = sadd.s32 %s119, 1
      %s121 = scalar_select %p118, %s119, %s120
      %p124 = pneg %p118
      %p125 = scmp.eq.s32.totalorder %s15, 1
      %p126 = por %p124, %p125
      %p127 = scmp.ne.s32.totalorder %s119, %s122
      %p128 = scmp.eq.s32.totalorder %s15, 0
      %p129 = por %p127, %p128
      %p130 = scmp.ne.s32.totalorder %s119, %s122
      %p131 = scmp.eq.s32.totalorder %s20, 1
      %p132 = por %p130, %p131
      %p133 = scmp.ne.s32.totalorder %s122, %s123
      %p134 = scmp.eq.s32.totalorder %s20, 0
      %p135 = por %p133, %p134
      %p136 = scmp.ne.s32.totalorder %s122, %s123
      %p137 = scmp.eq.s32.totalorder %s21, 1
      %p138 = por %p136, %p137
      %p140 = scmp.ne.s32.totalorder %s123, %s139
      %p141 = scmp.eq.s32.totalorder %s21, 0
      %p142 = por %p140, %p141
      %p143 = scmp.le.s32.totalorder 1, %s15
      %p144 = scmp.lt.s32.totalorder %s15, 3
      %p145 = pnand %p143, %p144
      %p146 = pneg %p145
      // Predicated region
      $region9: #{tpu_custom_call.1} parent=5 // pred_check
        _
      $region10: #{tpu_custom_call.1} parent=5 // pred_check_branch
        %148 = sbr.rel (%p145) target = $region12
      $region11: #{tpu_custom_call.1} parent=5 // pred_region
        %s149 = ssub.s32 %s15, 1
        // Predicated region
        $region13: #{tpu_custom_call.1} parent=11 // pred_check
          %p150 = pneg %p79
        $region14: #{tpu_custom_call.1} parent=11 // pred_check_branch
          %152 = sbr.rel (%p150) target = $region16
        $region15: #{tpu_custom_call.1} parent=11 // pred_region
          %s153 = smul.u32 2, %s25
          %p154 = scmp.lt.s32.totalorder %s153, 1
          %s155 = scalar_select %p154, %s153, 1
          %s156 = smul.addr %s155, 2
          %s157 = scalar_lea.vmem %s2, %s156
          %s158 = smul.u32 2, %s25
        $region16: #{tpu_custom_call.1} parent=11 // pred_fallthru
          _
      $region12: #{tpu_custom_call.1} parent=5 // pred_fallthru
        _
      %p159 = scmp.lt.s32.totalorder %s15, 2
      // Predicated region
      $region17: #{tpu_custom_call.1} parent=5 // pred_check
        %p160 = pneg %p159
      $region18: #{tpu_custom_call.1} parent=5 // pred_check_branch
        %162 = sbr.rel (%p160) target = $region20
      $region19: #{tpu_custom_call.1} parent=5 // pred_region
        // Predicated region
        $region21: #{tpu_custom_call.1} parent=19 // pred_check
          %p163 = pneg %p47
        $region22: #{tpu_custom_call.1} parent=19 // pred_check_branch
          %165 = sbr.rel (%p163) target = $region24
        $region23: #{tpu_custom_call.1} parent=19 // pred_region
          %p166 = scmp.lt.s32.totalorder %s22, 1
          %s167 = scalar_select %p166, %s22, 1
          %s168 = smul.addr %s167, 10
          %s169 = smul.addr %s168, 4
          %s170 = scalar_lea.vmem %s1, %s169
        $region24: #{tpu_custom_call.1} parent=19 // pred_fallthru
          _
      $region20: #{tpu_custom_call.1} parent=5 // pred_fallthru
        _
      %p171 = scmp.le.s32.totalorder 1, %s15
      %p172 = scmp.lt.s32.totalorder %s15, 3
      %p173 = pnand %p171, %p172
      %p174 = pneg %p173
      // Predicated region
      $region25: #{tpu_custom_call.1} parent=5 // pred_check
        _
      $region26: #{tpu_custom_call.1} parent=5 // pred_check_branch
        %176 = sbr.rel (%p173) target = $region28
      $region27: #{tpu_custom_call.1} parent=5 // pred_region
        %s177 = ssub.s32 %s15, 1
        %p178 = scmp.lt.s32.totalorder %s24, 1
        %s179 = scalar_select %p178, %s24, 1
        %s180 = smul.addr %s179, 10
        %s181 = smul.addr %s180, 4
        %s182 = scalar_lea.vmem %s1, %s181
        %p183 = pneg %p53
        %p184 = pneg %p50
        %s185 = smul.u32 2, %s25
        %p186 = scmp.lt.s32.totalorder %s185, 1
        %s187 = scalar_select %p186, %s185, 1
        %s188 = smul.addr %s187, 2
        %s189 = scalar_lea.vmem %s2, %s188
        %p190 = pneg %p79
        %p191 = pneg %p76
        %p192 = pneg %p107
        %p193 = pneg %p104
        %s194 = sand.u32 %s94, 1
        %s195 = scalar_lea.sflag [#allocation5], %s194
        %s196 = sand.u32 %s94, 1
        %s197 = smul.addr %s196, 8
        %s198 = scalar_lea.vmem [#allocation4], %s197
        %p199 = pneg %p135
        %p200 = pneg %p132
        %s201 = smul.u32 2, %s25
        %p202 = scmp.lt.s32.totalorder %s24, 1
        %s203 = scalar_select %p202, %s24, 1
        %p204 = scmp.lt.s32.totalorder %s201, 1
        %s205 = scalar_select %p204, %s201, 1
        %s206 = smul.addr %s203, 2
        %s207 = sadd.s32 %s205, %s206
        %s208 = scalar_lea.vmem %s4, %s207
        %p209 = scmp.lt.s32.totalorder %s24, 1
        %s210 = scalar_select %p209, %s24, 1
        %s211 = smul.addr %s210, 10
        %s212 = smul.addr %s211, 4
        %s213 = scalar_lea.vmem %s1, %s212
        %s214 = smul.u32 2, %s25
        %p215 = scmp.lt.s32.totalorder %s214, 1
        %s216 = scalar_select %p215, %s214, 1
        %s217 = smul.addr %s216, 2
        %s218 = scalar_lea.vmem %s2, %s217
        %s219 = smul.u32 2, %s25
        %s220 = smul.u32 2, %s25
        %s221 = smul.u32 2, %s25
        %p222 = scmp.lt.s32.totalorder %s24, 1
        %s223 = scalar_select %p222, %s24, 1
        %p224 = scmp.lt.s32.totalorder %s221, 1
        %s225 = scalar_select %p224, %s221, 1
        %s226 = smul.addr %s223, 2
        %s227 = sadd.s32 %s225, %s226
        %s228 = scalar_lea.vmem %s4, %s227
        %s229 = smul.u32 2, %s25
        %v233 = vld [vmem:[%s218] ss:$2 sm:$0x3]
        %s234 = scalar_lea.vmem %s218, 1
        %v235 = vld [vmem:[%s234] ss:$2 sm:$0x3]
        %v236 = vadd.f32 %v233, 1.0
        %v237 = vmul.f32 %v236, 16.0
        %v238 = vsub.f32 %v237, 1.0
        %v239 = vmul.f32 %v238, 0.5
        %v240 = vmax.f32 %v239, 0.0
        %v241 = vmin.f32 %v240, 15.0
        %v242 = vadd.f32 %v235, 1.0
        %v243 = vmul.f32 %v242, 16.0
        %v244 = vsub.f32 %v243, 1.0
        %v245 = vmul.f32 %v244, 0.5
        %v246 = vmax.f32 %v245, 0.0
        %v247 = vmin.f32 %v246, 15.0
        %v248 = vlaneseq
        %v249 = vshrl.u32 %v248, 7
        %v250 = vadd.s32 %v249, 8
        %v251 = vcvt.s32.f32 %v249
        %v252 = vcvt.s32.f32 %v250
        %v254 = vperm.slane %v241, 0
        %v255 = vperm.slane %v241, 1
        %v258 = vsub.f32 %v251, %v254
        %v259 = vsub.f32 %v251, %v255
        %v260 = vsub.f32 %v252, %v254
        %v261 = vsub.f32 %v252, %v255
        %v262 = vand.u32 2147483647, %v258
        %v263 = vand.u32 2147483647, %v259
        %v264 = vand.u32 2147483647, %v260
        %v265 = vand.u32 2147483647, %v261
        %v266 = vsub.f32 1.0, %v262
        %v267 = vsub.f32 1.0, %v263
        %v268 = vsub.f32 1.0, %v264
        %v269 = vsub.f32 1.0, %v265
        %v270 = vmax.f32 %v266, 0.0
        %v271 = vmax.f32 %v267, 0.0
        %v272 = vmax.f32 %v268, 0.0
        %v273 = vmax.f32 %v269, 0.0
        %v274 = vpack.c.bf16 %v272, %v270
        %v275 = vpack.c.bf16 %v273, %v271
        %v276 = vld [vmem:[%s213] sm:$0xf]
        %v277 = vld [vmem:[%s213 + $0x4] sm:$0xf]
        %v278 = vld [vmem:[%s213 + $0x8] sm:$0xf]
        %v279 = vld [vmem:[%s213 + $0xc] sm:$0xf]
        %v280 = vld [vmem:[%s213 + $0x10] sm:$0xf]
        %v281 = vld [vmem:[%s213 + $0x14] sm:$0xf]
        %v282 = vld [vmem:[%s213 + $0x18] sm:$0xf]
        %v283 = vld [vmem:[%s213 + $0x1c] sm:$0xf]
        %v284 = vld [vmem:[%s213 + $0x20] sm:$0xf]
        %v285 = vld [vmem:[%s213 + $0x24] sm:$0xf]
        %v296 = vunpack.c.l.b16 %v276
        %v297 = vunpack.c.l.b16 %v277
        %v298 = vunpack.c.l.b16 %v278
        %v299 = vunpack.c.l.b16 %v279
        %v300 = vunpack.c.l.b16 %v280
        %v301 = vunpack.c.l.b16 %v281
        %v302 = vunpack.c.l.b16 %v282
        %v303 = vunpack.c.l.b16 %v283
        %v304 = vunpack.c.l.b16 %v284
        %v305 = vunpack.c.l.b16 %v285
        %v306 = vpack.c.b16 %v297, %v296
        %v307 = vpack.c.b16 %v299, %v298
        %v308 = vpack.c.b16 %v301, %v300
        %v309 = vpack.c.b16 %v303, %v302
        %v310 = vpack.c.b16 %v305, %v304
        %vm311 = vcmask 130048
        %v313 = vsel %vm311, %v306, 0
        %v316 = vsel %vm311, %v307, 0
        %v319 = vsel %vm311, %v308, 0
        %v322 = vsel %vm311, %v309, 0
        %v325 = vsel %vm311, %v310, 0
        %327 = vmatpush.bf16.msra.mxu0 0
        %328 = vmatpush.bf16.msra.mxu0 0
        %329 = vmatpush.bf16.msra.mxu0 0
        %330 = vmatpush.bf16.msra.mxu0 0
        %331 = vmatpush.bf16.msra.mxu0 0
        %332 = vmatpush.bf16.msra.mxu0 0
        %333 = vmatpush.bf16.msra.mxu0 0
        %334 = vmatpush.bf16.msra.mxu0 %v274
        %335 = vmatmul.bf16.gmra.mxu0 %v313
        %v336 = vpop.f32.mrf.mxu0
        %v337 = vadd.f32 0.0, %v336
        %v338 = vpop.f32.mrf.mxu0
        %v339 = vadd.f32 0.0, %v338
        %340 = vmatmul.bf16.gmra.mxu0 %v316
        %v341 = vpop.f32.mrf.mxu0
        %v342 = vadd.f32 0.0, %v341
        %v343 = vpop.f32.mrf.mxu0
        %v344 = vadd.f32 0.0, %v343
        %345 = vmatmul.bf16.gmra.mxu0 %v319
        %v346 = vpop.f32.mrf.mxu0
        %v347 = vadd.f32 0.0, %v346
        %v348 = vpop.f32.mrf.mxu0
        %v349 = vadd.f32 0.0, %v348
        %350 = vmatmul.bf16.gmra.mxu0 %v322
        %v351 = vpop.f32.mrf.mxu0
        %v352 = vadd.f32 0.0, %v351
        %v353 = vpop.f32.mrf.mxu0
        %v354 = vadd.f32 0.0, %v353
        %355 = vmatmul.bf16.gmra.mxu0 %v325
        %v356 = vpop.f32.mrf.mxu0
        %v357 = vadd.f32 0.0, %v356
        %v358 = vpop.f32.mrf.mxu0
        %v359 = vadd.f32 0.0, %v358
        %360 = vdwg.mxu0
        %361 = vmatpush.bf16.msra.mxu0 0
        %362 = vmatpush.bf16.msra.mxu0 0
        %363 = vmatpush.bf16.msra.mxu0 0
        %364 = vmatpush.bf16.msra.mxu0 0
        %365 = vmatpush.bf16.msra.mxu0 0
        %366 = vmatpush.bf16.msra.mxu0 0
        %367 = vmatpush.bf16.msra.mxu0 0
        %368 = vmatpush.bf16.msra.mxu0 %v275
        %369 = vmatmul.bf16.gmra.mxu0 %v313
        %v370 = vpop.f32.mrf.mxu0
        %v371 = vadd.f32 0.0, %v370
        %v372 = vpop.f32.mrf.mxu0
        %v373 = vadd.f32 0.0, %v372
        %374 = vmatmul.bf16.gmra.mxu0 %v316
        %v375 = vpop.f32.mrf.mxu0
        %v376 = vadd.f32 0.0, %v375
        %v377 = vpop.f32.mrf.mxu0
        %v378 = vadd.f32 0.0, %v377
        %379 = vmatmul.bf16.gmra.mxu0 %v319
        %v380 = vpop.f32.mrf.mxu0
        %v381 = vadd.f32 0.0, %v380
        %v382 = vpop.f32.mrf.mxu0
        %v383 = vadd.f32 0.0, %v382
        %384 = vmatmul.bf16.gmra.mxu0 %v322
        %v385 = vpop.f32.mrf.mxu0
        %v386 = vadd.f32 0.0, %v385
        %v387 = vpop.f32.mrf.mxu0
        %v388 = vadd.f32 0.0, %v387
        %389 = vmatmul.bf16.gmra.mxu0 %v325
        %v390 = vpop.f32.mrf.mxu0
        %v391 = vadd.f32 0.0, %v390
        %v392 = vpop.f32.mrf.mxu0
        %v393 = vadd.f32 0.0, %v392
        %394 = vdwg.mxu0
        %v396 = vperm.slane %v247, 0
        %v397 = vperm.slane %v247, 1
        %v400 = vsub.f32 %v251, %v396
        %v401 = vsub.f32 %v251, %v397
        %v402 = vsub.f32 %v252, %v396
        %v403 = vsub.f32 %v252, %v397
        %v404 = vand.u32 2147483647, %v400
        %v405 = vand.u32 2147483647, %v401
        %v406 = vand.u32 2147483647, %v402
        %v407 = vand.u32 2147483647, %v403
        %v408 = vsub.f32 1.0, %v404
        %v409 = vsub.f32 1.0, %v405
        %v410 = vsub.f32 1.0, %v406
        %v411 = vsub.f32 1.0, %v407
        %v412 = vmax.f32 %v408, 0.0
        %v413 = vmax.f32 %v409, 0.0
        %v414 = vmax.f32 %v410, 0.0
        %v415 = vmax.f32 %v411, 0.0
        %v416 = vmul.f32 %v337, %v412
        %v417 = vmul.f32 %v371, %v413
        %v418 = vmul.f32 %v339, %v414
        %v419 = vmul.f32 %v373, %v415
        %v420 = vmul.f32 %v342, %v412
        %v421 = vmul.f32 %v376, %v413
        %v422 = vmul.f32 %v344, %v414
        %v423 = vmul.f32 %v378, %v415
        %v424 = vmul.f32 %v347, %v412
        %v425 = vmul.f32 %v381, %v413
        %v426 = vmul.f32 %v349, %v414
        %v427 = vmul.f32 %v383, %v415
        %v428 = vmul.f32 %v352, %v412
        %v429 = vmul.f32 %v386, %v413
        %v430 = vmul.f32 %v354, %v414
        %v431 = vmul.f32 %v388, %v415
        %v432 = vmul.f32 %v357, %v412
        %v433 = vmul.f32 %v391, %v413
        %v434 = vmul.f32 %v359, %v414
        %v435 = vmul.f32 %v393, %v415
        %v436 = vadd.f32 %v416, %v418
        %v437 = vrot.slane %v436, 4
        %v438 = vadd.f32 %v436, %v437
        %v439 = vrot.slane %v438, 2
        %v440 = vadd.f32 %v438, %v439
        %v441 = vrot.slane %v440, 1
        %v442 = vadd.f32 %v440, %v441
        %v443 = vadd.f32 %v417, %v419
        %v444 = vrot.slane %v443, 4
        %v445 = vadd.f32 %v443, %v444
        %v446 = vrot.slane %v445, 2
        %v447 = vadd.f32 %v445, %v446
        %v448 = vrot.slane %v447, 1
        %v449 = vadd.f32 %v447, %v448
        %v450 = vadd.f32 %v420, %v422
        %v451 = vrot.slane %v450, 4
        %v452 = vadd.f32 %v450, %v451
        %v453 = vrot.slane %v452, 2
        %v454 = vadd.f32 %v452, %v453
        %v455 = vrot.slane %v454, 1
        %v456 = vadd.f32 %v454, %v455
        %v457 = vadd.f32 %v421, %v423
        %v458 = vrot.slane %v457, 4
        %v459 = vadd.f32 %v457, %v458
        %v460 = vrot.slane %v459, 2
        %v461 = vadd.f32 %v459, %v460
        %v462 = vrot.slane %v461, 1
        %v463 = vadd.f32 %v461, %v462
        %v464 = vadd.f32 %v424, %v426
        %v465 = vrot.slane %v464, 4
        %v466 = vadd.f32 %v464, %v465
        %v467 = vrot.slane %v466, 2
        %v468 = vadd.f32 %v466, %v467
        %v469 = vrot.slane %v468, 1
        %v470 = vadd.f32 %v468, %v469
        %v471 = vadd.f32 %v425, %v427
        %v472 = vrot.slane %v471, 4
        %v473 = vadd.f32 %v471, %v472
        %v474 = vrot.slane %v473, 2
        %v475 = vadd.f32 %v473, %v474
        %v476 = vrot.slane %v475, 1
        %v477 = vadd.f32 %v475, %v476
        %v478 = vadd.f32 %v428, %v430
        %v479 = vrot.slane %v478, 4
        %v480 = vadd.f32 %v478, %v479
        %v481 = vrot.slane %v480, 2
        %v482 = vadd.f32 %v480, %v481
        %v483 = vrot.slane %v482, 1
        %v484 = vadd.f32 %v482, %v483
        %v485 = vadd.f32 %v429, %v431
        %v486 = vrot.slane %v485, 4
        %v487 = vadd.f32 %v485, %v486
        %v488 = vrot.slane %v487, 2
        %v489 = vadd.f32 %v487, %v488
        %v490 = vrot.slane %v489, 1
        %v491 = vadd.f32 %v489, %v490
        %v492 = vadd.f32 %v432, %v434
        %v493 = vrot.slane %v492, 4
        %v494 = vadd.f32 %v492, %v493
        %v495 = vrot.slane %v494, 2
        %v496 = vadd.f32 %v494, %v495
        %v497 = vrot.slane %v496, 1
        %v498 = vadd.f32 %v496, %v497
        %v499 = vadd.f32 %v433, %v435
        %v500 = vrot.slane %v499, 4
        %v501 = vadd.f32 %v499, %v500
        %v502 = vrot.slane %v501, 2
        %v503 = vadd.f32 %v501, %v502
        %v504 = vrot.slane %v503, 1
        %v505 = vadd.f32 %v503, %v504
        %v506 = vlaneseq
        %v507 = vand.u32 %v506, 127
        %v508 = vadd.s32 %v507, 128
        %s509 = smul.u32 %s25, 256
        %v510 = vstv %s509
        %v511 = vadd.s32 %v510, %v507
        %v512 = vadd.s32 %v510, %v508
        %s513 = smul.u32 %s24, 4
        %v514 = vstv %s513
        %v515 = vadd.s32 %v514, %v249
        %v516 = vmul.u32 %v515, 256
        %v517 = vadd.s32 %v516, %v511
        %v518 = vadd.s32 %v516, %v512
        %s519 = sld [smem:[#allocation3]]
        %s520 = smul.u32 %s519, 668265263
        %v521 = vmul.u32 %v517, 4
        %v522 = vmul.u32 %v518, 4
        %v523 = vstv %s520
        %v524 = vadd.s32 %v521, %v523
        %v525 = vadd.s32 %v522, %v523
        %v526 = vmul.u32 %v524, 2146121005
        %v527 = vmul.u32 %v525, 2146121005
        %v528 = vand.u32 %v526, 2147483647
        %v529 = vand.u32 %v527, 2147483647
        %v530 = vshra.s32 %v528, 15
        %v531 = vshra.s32 %v529, 15
        %v532 = vxor.u32 %v526, %v530
        %v533 = vxor.u32 %v527, %v531
        %v534 = vmul.u32 %v532, 2221713035
        %v535 = vmul.u32 %v533, 2221713035
        %v536 = vand.u32 %v534, 2147483647
        %v537 = vand.u32 %v535, 2147483647
        %v538 = vshra.s32 %v536, 13
        %v539 = vshra.s32 %v537, 13
        %v540 = vxor.u32 %v534, %v538
        %v541 = vxor.u32 %v535, %v539
        %v542 = vand.u32 %v540, 8388607
        %v543 = vand.u32 %v541, 8388607
        %v544 = vcvt.s32.f32 %v542
        %v545 = vcvt.s32.f32 %v543
        %v546 = vmul.f32 %v544, 1.1920929e-07
        %v547 = vmul.f32 %v545, 1.1920929e-07
        %v548 = vadd.f32 %v546, 0.0
        %v549 = vadd.f32 %v547, 0.0
        %v550 = vadd.s32 %v521, 1
        %v551 = vadd.s32 %v522, 1
        %v552 = vadd.s32 %v550, %v523
        %v553 = vadd.s32 %v551, %v523
        %v554 = vmul.u32 %v552, 2146121005
        %v555 = vmul.u32 %v553, 2146121005
        %v556 = vand.u32 %v554, 2147483647
        %v557 = vand.u32 %v555, 2147483647
        %v558 = vshra.s32 %v556, 15
        %v559 = vshra.s32 %v557, 15
        %v560 = vxor.u32 %v554, %v558
        %v561 = vxor.u32 %v555, %v559
        %v562 = vmul.u32 %v560, 2221713035
        %v563 = vmul.u32 %v561, 2221713035
        %v564 = vand.u32 %v562, 2147483647
        %v565 = vand.u32 %v563, 2147483647
        %v566 = vshra.s32 %v564, 13
        %v567 = vshra.s32 %v565, 13
        %v568 = vxor.u32 %v562, %v566
        %v569 = vxor.u32 %v563, %v567
        %v570 = vand.u32 %v568, 8388607
        %v571 = vand.u32 %v569, 8388607
        %v572 = vcvt.s32.f32 %v570
        %v573 = vcvt.s32.f32 %v571
        %v574 = vmul.f32 %v572, 1.1920929e-07
        %v575 = vmul.f32 %v573, 1.1920929e-07
        %v576 = vadd.f32 %v548, %v574
        %v577 = vadd.f32 %v549, %v575
        %v578 = vadd.s32 %v521, 2
        %v579 = vadd.s32 %v522, 2
        %v580 = vadd.s32 %v578, %v523
        %v581 = vadd.s32 %v579, %v523
        %v582 = vmul.u32 %v580, 2146121005
        %v583 = vmul.u32 %v581, 2146121005
        %v584 = vand.u32 %v582, 2147483647
        %v585 = vand.u32 %v583, 2147483647
        %v586 = vshra.s32 %v584, 15
        %v587 = vshra.s32 %v585, 15
        %v588 = vxor.u32 %v582, %v586
        %v589 = vxor.u32 %v583, %v587
        %v590 = vmul.u32 %v588, 2221713035
        %v591 = vmul.u32 %v589, 2221713035
        %v592 = vand.u32 %v590, 2147483647
        %v593 = vand.u32 %v591, 2147483647
        %v594 = vshra.s32 %v592, 13
        %v595 = vshra.s32 %v593, 13
        %v596 = vxor.u32 %v590, %v594
        %v597 = vxor.u32 %v591, %v595
        %v598 = vand.u32 %v596, 8388607
        %v599 = vand.u32 %v597, 8388607
        %v600 = vcvt.s32.f32 %v598
        %v601 = vcvt.s32.f32 %v599
        %v602 = vmul.f32 %v600, 1.1920929e-07
        %v603 = vmul.f32 %v601, 1.1920929e-07
        %v604 = vadd.f32 %v576, %v602
        %v605 = vadd.f32 %v577, %v603
        %v606 = vadd.s32 %v521, 3
        %v607 = vadd.s32 %v522, 3
        %v608 = vadd.s32 %v606, %v523
        %v609 = vadd.s32 %v607, %v523
        %v610 = vmul.u32 %v608, 2146121005
        %v611 = vmul.u32 %v609, 2146121005
        %v612 = vand.u32 %v610, 2147483647
        %v613 = vand.u32 %v611, 2147483647
        %v614 = vshra.s32 %v612, 15
        %v615 = vshra.s32 %v613, 15
        %v616 = vxor.u32 %v610, %v614
        %v617 = vxor.u32 %v611, %v615
        %v618 = vmul.u32 %v616, 2221713035
        %v619 = vmul.u32 %v617, 2221713035
        %v620 = vand.u32 %v618, 2147483647
        %v621 = vand.u32 %v619, 2147483647
        %v622 = vshra.s32 %v620, 13
        %v623 = vshra.s32 %v621, 13
        %v624 = vxor.u32 %v618, %v622
        %v625 = vxor.u32 %v619, %v623
        %v626 = vand.u32 %v624, 8388607
        %v627 = vand.u32 %v625, 8388607
        %v628 = vcvt.s32.f32 %v626
        %v629 = vcvt.s32.f32 %v627
        %v630 = vmul.f32 %v628, 1.1920929e-07
        %v631 = vmul.f32 %v629, 1.1920929e-07
        %v632 = vadd.f32 %v604, %v630
        %v633 = vadd.f32 %v605, %v631
        %v634 = vsub.f32 %v632, 2.0
        %v635 = vsub.f32 %v633, 2.0
        %v636 = vmul.f32 %v634, 1.7320508
        %v637 = vmul.f32 %v635, 1.7320508
        %v638 = vmul.f32 %v636, 0.02
        %v639 = vmul.f32 %v637, 0.02
        %v642 = vrot.slane %v638, 1
        %v643 = vrot.slane %v639, 1
        %v644 = vrot.slane %v638, 2
        %v645 = vrot.slane %v639, 2
        %v646 = vrot.slane %v638, 3
        %v647 = vrot.slane %v639, 3
        %v656 = vadd.f32 %v442, %v638
        %v657 = vadd.f32 %v449, %v639
        %v658 = vadd.f32 %v456, %v642
        %v659 = vadd.f32 %v463, %v643
        %v660 = vadd.f32 %v470, %v644
        %v661 = vadd.f32 %v477, %v645
        %v662 = vadd.f32 %v484, %v646
        %v663 = vadd.f32 %v491, %v647
        %v672 = vrot.slane %v657, 4
        %v673 = vrot.slane %v659, 4
        %v674 = vrot.slane %v661, 4
        %v675 = vrot.slane %v663, 4
        %vm676 = vcmask 1043456
        %v677 = vsel %vm676, %v656, %v672
        %v678 = vsel %vm676, %v658, %v673
        %v679 = vsel %vm676, %v660, %v674
        %v680 = vsel %vm676, %v662, %v675
        %v681 = vrot.slane %v678, 7
        %vm682 = vcmask 1041409
        %v683 = vsel %vm682, %v681, %v677
        %vm684 = vcmask 1045509
        %v685 = vsel %vm684, %v681, %v683
        %v686 = vrot.slane %v679, 6
        %vm687 = vcmask 1042434
        %v688 = vsel %vm687, %v686, %v685
        %vm689 = vcmask 1046534
        %v690 = vsel %vm689, %v686, %v688
        %v691 = vrot.slane %v680, 5
        %vm692 = vcmask 1043459
        %v693 = vsel %vm692, %v691, %v690
        %vm694 = vcmask 1047559
        %v695 = vsel %vm694, %v691, %v693
        %697 = vst [vmem:[%s198] sm:$0xff] %v695
        %vm698 = vcmp.gt.f32.partialorder %v498, 0.5
        %vm699 = vcmp.gt.f32.partialorder %v505, 0.5
        %vm700 = vmpackc.low %vm699, %vm698
        %v701 = vsel %vm700, 16711935, 0
        %v702 = vsel %vm700, 16711935, 0
        %v703 = vpack.c.b8 %v702, %v701
        %vm704 = vnez %v703
        %v705 = vsel %vm704, 16843009, 0
        %v706 = vperm.slane %v705, 0
        %v707 = vperm.slane %v705, 2
        %vm708 = vnez %v706
        %vm709 = vnez %v707
        %v710 = vsel %vm708, 16843009, 0
        %v711 = vsel %vm709, 16843009, 0
        %v712 = vrot.slane %v711, 7
        %vm713 = vcmask 1040384
        %v716 = vsel %vm713, %v710, %v712
        %vm718 = vcmask 1040384
        %vm719 = vsmask.f32 0
        %vm720 = vmand %vm718, %vm719
        %vm721 = vcmask 1041409
        %vm722 = vsmask.f32 1024
        %vm723 = vmand %vm721, %vm722
        %vm724 = vmor %vm723, %vm720
        %v725 = vld [vmem:[%s228] sm:$0x3]
        %v726 = vsel %vm724, %v716, %v725
        %727 = vst [vmem:[%s228] sm:$0x3] %v726
        %s728 = sand.u32 %s94, 1
        %s729 = scalar_lea.sflag [#allocation5], %s728
        %s730 = sand.u32 %s94, 1
        %s731 = smul.addr %s730, 8
        %s732 = scalar_lea.vmem [#allocation4], %s731
        %s733 = smul.u32 2, %s25
        %p734 = scmp.lt.s32.totalorder %s24, 1
        %s735 = scalar_select %p734, %s24, 1
        %p736 = scmp.lt.s32.totalorder %s733, 1
        %s737 = scalar_select %p736, %s733, 1
        %s738 = smul.addr %s735, 2
        %s739 = sadd.s32 %s737, %s738
        %s740 = scalar_lea.vmem %s4, %s739
        // Predicated region
        $region29: #{tpu_custom_call.1} parent=27 // pred_check
          %p741 = pneg %p104
        $region30: #{tpu_custom_call.1} parent=27 // pred_check_branch
          %743 = sbr.rel (%p741) target = $region32
        $region31: #{tpu_custom_call.1} parent=27 // pred_region
          %s744 = smul.u32 2, %s25
          %746 = vsyncadd %s729, 0
          %s747 = smul.addr %s24, 2
          %s748 = sadd.s32 %s744, %s747
          %s749 = smul.addr %s748, 4
          %s750 = scalar_lea.hbm %s3, %s749
          %s752 = sshll.u32 %s732, 4
          %s753 = int_to_ptr.vmem [resolvable:$true] %s752
          %s754 = sshll.u32 %s750, 4
          %s755 = int_to_ptr.hbm [resolvable:$true] %s754
          %757 = dma.vmem_to_hbm [thread:$0]  %s753, 128, %s755, %s729
        $region32: #{tpu_custom_call.1} parent=27 // pred_fallthru
          _
        // Predicated region
        $region33: #{tpu_custom_call.1} parent=27 // pred_check
          %p758 = pneg %p132
        $region34: #{tpu_custom_call.1} parent=27 // pred_check_branch
          %760 = sbr.rel (%p758) target = $region36
        $region35: #{tpu_custom_call.1} parent=27 // pred_region
          %s761 = smul.u32 2, %s25
        $region36: #{tpu_custom_call.1} parent=27 // pred_fallthru
          _
      $region28: #{tpu_custom_call.1} parent=5 // pred_fallthru
        _
      %p762 = scmp.le.s32.totalorder 2, %s15
      // Predicated region
      $region37: #{tpu_custom_call.1} parent=5 // pred_check
        %p763 = pneg %p762
      $region38: #{tpu_custom_call.1} parent=5 // pred_check_branch
        %765 = sbr.rel (%p763) target = $region40
      $region39: #{tpu_custom_call.1} parent=5 // pred_region
        %s766 = ssub.s32 %s15, 2
        // Predicated region
        $region41: #{tpu_custom_call.1} parent=39 // pred_check
          %p767 = pneg %p110
        $region42: #{tpu_custom_call.1} parent=39 // pred_check_branch
          %769 = sbr.rel (%p767) target = $region44
        $region43: #{tpu_custom_call.1} parent=39 // pred_region
          %s770 = sand.u32 %s95, 1
          %s771 = scalar_lea.sflag [#allocation5], %s770
          %s772 = sand.u32 %s95, 1
          %s773 = smul.addr %s772, 8
          %s774 = scalar_lea.vmem [#allocation4], %s773
          %776 = dma.done %s771, 128
        $region44: #{tpu_custom_call.1} parent=39 // pred_fallthru
          _
        // Predicated region
        $region45: #{tpu_custom_call.1} parent=39 // pred_check
          %p777 = pneg %p138
        $region46: #{tpu_custom_call.1} parent=39 // pred_check_branch
          %779 = sbr.rel (%p777) target = $region48
        $region47: #{tpu_custom_call.1} parent=39 // pred_region
          %s780 = smul.u32 2, %s27
          %p781 = scmp.lt.s32.totalorder %s26, 1
          %s782 = scalar_select %p781, %s26, 1
          %p783 = scmp.lt.s32.totalorder %s780, 1
          %s784 = scalar_select %p783, %s780, 1
          %s785 = smul.addr %s782, 2
          %s786 = sadd.s32 %s784, %s785
          %s787 = scalar_lea.vmem %s4, %s786
        $region48: #{tpu_custom_call.1} parent=39 // pred_fallthru
          _
      $region40: #{tpu_custom_call.1} parent=5 // pred_fallthru
        _
    $region6: #{tpu_custom_call.1} parent=1 // loop_footer
      %s19 = sadd.s32 1, %s15
    $region7: #{tpu_custom_call.1} parent=1 // loop_footer_branch
      %14 = sbr.rel target = $region3
    $region8: #{tpu_custom_call.1} parent=1 // loop_exit
      _
    %788 = vsyncpa [#allocation5], 1
    %s789 = scalar_lea.sflag [#allocation5], 1
    %790 = vsyncpa %s789, 1

</llo_original>
